<compile_context>
chip_gen: v6e
topology: v6e:2x2x1
jax: 0.10.0
libtpu: 0.0.40
codegen_flags: <defaults>
</compile_context>

<pallas_src>
import functools

import jax
import jax.numpy as jnp
from jax.experimental import pallas as pl
from jax.experimental.pallas import tpu as pltpu

_LANES = 128
# 2 MiB per block: in + out, each double-buffered -> 8 MiB total VMEM,
# under the 16 MiB default scoped VMEM on v5e (and far under v6e/v7x).
_MAX_BLOCK_BYTES = 2 * 1024 * 1024


def _rescale_kernel(x_ref, o_ref, *, scale, shift):
    x = x_ref[...]
    o_ref[...] = x * jnp.asarray(scale, x.dtype) + jnp.asarray(shift, x.dtype)


def _sublane_multiple(dtype) -> int:
    # Packed sublane tile: f32 -> 8, bf16/f16 -> 16, 1-byte dtypes -> 32.
    itemsize = jnp.dtype(dtype).itemsize
    return max(8, 32 // max(1, itemsize))


def rescale(x: jax.Array, low: float, high: float, *, donate: bool = False) -> jax.Array:
    assert high > low
    assert jnp.issubdtype(x.dtype, jnp.floating), "Rescale expects floating-point input"
    low = float(low)
    high = float(high)
    # Fold ((x + 1) / 2) * (high - low) + low  ->  x * scale + shift
    scale = (high - low) * 0.5
    shift = (high - low) * 0.5 + low

    orig_shape = x.shape
    total = x.size
    if total == 0:
        return x

    itemsize = jnp.dtype(x.dtype).itemsize
    sub = _sublane_multiple(x.dtype)

    # Lane-dense 2D slab: (rows, 128).  Fast path (total % 128 == 0) needs no
    # padding; the reshape of a contiguous array is free.
    pad = (-total) % _LANES
    x_flat = x.reshape(-1)
    if pad:
        # Rare ragged case: a single pad to the next lane multiple.
        x_flat = jnp.pad(x_flat, (0, pad))
    rows = x_flat.size // _LANES
    x2d = x_flat.reshape(rows, _LANES)

    if rows <= sub:
        # Tiny input: one full-extent block (exempt from the (8,128) rule).
        br = rows
    else:
        max_rows = _MAX_BLOCK_BYTES // (_LANES * itemsize)
        max_rows = max(sub, (max_rows // sub) * sub)
        br = min(max_rows, (rows // sub) * sub)
    grid = (pl.cdiv(rows, br),)  # ragged last block handled by Pallas masking

    kernel = functools.partial(_rescale_kernel, scale=scale, shift=shift)

    y2d = pl.pallas_call(
        kernel,
        out_shape=jax.ShapeDtypeStruct((rows, _LANES), x.dtype),
        grid_spec=pltpu.PrefetchScalarGridSpec(
            num_scalar_prefetch=0,
            grid=grid,
            in_specs=[pl.BlockSpec((br, _LANES), lambda i: (i, 0))],
            out_specs=pl.BlockSpec((br, _LANES), lambda i: (i, 0)),
        ),
        compiler_params=pltpu.CompilerParams(
            dimension_semantics=("parallel",),
        ),
        input_output_aliases=({0: 0} if donate else {}),
    )(x2d)

    y_flat = y2d.reshape(-1)
    if pad:
        y_flat = y_flat[:total]
    return y_flat.reshape(orig_shape)


if __name__ == "__main__":
    key = jax.random.PRNGKey(0)
    # NCHW, like the PyTorch convention: batch=2, channels=4, spatial=16x16
    x = jax.random.uniform(key, (2, 4, 16, 16), dtype=jnp.float32,
                           minval=-1.0, maxval=1.0)

    low, high = 0.0, 255.0
    y = rescale(x, low, high)
    jax.block_until_ready(y)

    # Reference check (plain JAX, same math as the PyTorch module).
    y_ref = ((x + 1.0) / 2.0) * (high - low) + low
    assert jnp.allclose(y, y_ref, atol=1e-5, rtol=1e-5), "mismatch vs reference"

    # Ragged shape exercising the (rare) single-pad fallback path.
    x2 = jax.random.uniform(jax.random.PRNGKey(1), (3, 5, 7), dtype=jnp.float32,
                            minval=-1.0, maxval=1.0)
    y2 = rescale(x2, -1.0, 1.0)
    jax.block_until_ready(y2)
    y2_ref = ((x2 + 1.0) / 2.0) * (1.0 - (-1.0)) + (-1.0)
    assert jnp.allclose(y2, y2_ref, atol=1e-5, rtol=1e-5), "mismatch vs reference (ragged)"

    print("KERNEL_OK")
</pallas_src>

<mosaic_0001>
module attributes {stable_mosaic.version = 11 : i64} {
  func.func @_rescale_kernel(%arg0: i32, %arg1: memref<16x128xf32, #tpu.memory_space<vmem>>, %arg2: memref<16x128xf32, #tpu.memory_space<vmem>>) attributes {dimension_semantics = [#tpu.dimension_semantics<parallel>], iteration_bounds = array<i64: 1>, scalar_prefetch = 0 : i64, scratch_operands = 0 : i64, tpu.core_type = #tpu.core_type<tc>, window_params = [{transform_indices = @transform_0, window_bounds = array<i64: 16, 128>}, {transform_indices = @transform_1, window_bounds = array<i64: 16, 128>}]} {
    %c0 = arith.constant 0 : index
    %c0_0 = arith.constant 0 : index
    %0 = vector.load %arg1[%c0, %c0_0] : memref<16x128xf32, #tpu.memory_space<vmem>>, vector<16x128xf32>
    %cst = arith.constant 1.275000e+02 : f32
    %1 = vector.broadcast %cst : f32 to vector<16x128xf32>
    %2 = arith.mulf %0, %1 : vector<16x128xf32>
    %cst_1 = arith.constant 1.275000e+02 : f32
    %3 = vector.broadcast %cst_1 : f32 to vector<16x128xf32>
    %4 = arith.addf %2, %3 : vector<16x128xf32>
    %c0_2 = arith.constant 0 : index
    %c0_3 = arith.constant 0 : index
    %5 = vector.load %arg2[%c0_2, %c0_3] : memref<16x128xf32, #tpu.memory_space<vmem>>, vector<16x128xf32>
    tpu.vector_store %arg2[%c0_2, %c0_3], %4 {strides = array<i32>} : memref<16x128xf32, #tpu.memory_space<vmem>>, vector<16x128xf32>,
    return
  }
  func.func @transform_0(%arg0: i32) -> (i32, i32) {
    %c0_i32 = arith.constant 0 : i32
    %c0_i32_0 = arith.constant 0 : i32
    return %arg0, %c0_i32 : i32, i32
  }
  func.func @transform_1(%arg0: i32) -> (i32, i32) {
    %c0_i32 = arith.constant 0 : i32
    %c0_i32_0 = arith.constant 0 : i32
    return %arg0, %c0_i32 : i32, i32
  }
}

</mosaic_0001>

<llo_original>
// kernel: tpu_custom_call.1
$region0: #{tpu_custom_call.1}
  #allocation0 [shape = 'u32[]', space=smem, size = 0x4, offset = 0x4, fixed_abs, tag = 'smem constant byte address 0x4 - core index']
  #allocation1 [shape = 'u32[144,128]{1,0:T(1,128)}', space=vmem, size = 0x12000, scoped, tag = 'internal scratch']
  %s0 = inlined_call_operand.hbm [shape: f32[16,128], index: 0, kind: input, shape index: {}]
  %s1 = inlined_call_operand.hbm [shape: f32[16,128], index: 1, kind: output, shape index: {}]
  %s2 = sld [smem:[#allocation0]]
  $region18: #{tpu_custom_call.1} parent=0
    _
  %s4 = ssub.s32 1, %s2
  %s5 = scalar_select 0, %s4, %s2
  $region1: #{tpu_custom_call.1} parent=0
    #allocation2 [shape = 'u8[8192]{0}', space=vmem, size = 0x2000, scoped, tag = 'input window, operand 0, single buffered']
    #allocation3 [shape = 's32[1]{0}', space=sflag, size = 0x4, scoped, tag = 'scoped memory for tpu_custom_call.1']
    #allocation4 [shape = 's32[1]{0}', space=sflag, size = 0x4, scoped, tag = 'scoped memory for tpu_custom_call.1']
    #allocation5 [shape = 'u8[8192]{0}', space=vmem, size = 0x2000, scoped, tag = 'output window, operand 0, single buffered']
    %6 = vsyncpa [#allocation3], 0
    %7 = vsyncpa [#allocation4], 0
    // Predicated region
    $region2: #{tpu_custom_call.1} parent=1 // pred_check
      _
    $region3: #{tpu_custom_call.1} parent=1 // pred_check_branch
      %9 = sbr.rel (0) target = $region5
    $region4: #{tpu_custom_call.1} parent=1 // pred_region
      %s11 = ssub.s32 256, 256
      %12 = vsyncadd [#allocation3], %s11
      %s13 = sshll.u32 [#allocation2], 4
      %s14 = int_to_ptr.vmem [resolvable:$true] %s13
      %19 = dma.hbm_to_vmem [thread:$0]  %s0, 256, %s14, [#allocation3], 128, 128, 8
    $region5: #{tpu_custom_call.1} parent=1 // pred_fallthru
      _
    // Predicated region
    $region6: #{tpu_custom_call.1} parent=1 // pred_check
      _
    $region7: #{tpu_custom_call.1} parent=1 // pred_check_branch
      %21 = sbr.rel (0) target = $region9
    $region8: #{tpu_custom_call.1} parent=1 // pred_region
      %22 = dma.done [#allocation3], 256
    $region9: #{tpu_custom_call.1} parent=1 // pred_fallthru
      _
    %v23 = vld [vmem:[#allocation2] sm:$0xff]
    %v24 = vld [vmem:[#allocation2 + $0x8] sm:$0xff]
    %v25 = vmul.f32 %v23, 127.5
    %v26 = vmul.f32 %v24, 127.5
    %v27 = vadd.f32 %v25, 127.5
    %v28 = vadd.f32 %v26, 127.5
    %29 = vst [vmem:[#allocation5] sm:$0xff] %v27
    %30 = vst [vmem:[#allocation5 + $0x8] sm:$0xff] %v28
    // Predicated region
    $region10: #{tpu_custom_call.1} parent=1 // pred_check
      _
    $region11: #{tpu_custom_call.1} parent=1 // pred_check_branch
      %32 = sbr.rel (0) target = $region13
    $region12: #{tpu_custom_call.1} parent=1 // pred_region
      %s34 = ssub.s32 256, 256
      %35 = vsyncadd [#allocation4], %s34
      %s36 = sshll.u32 [#allocation5], 4
      %s37 = int_to_ptr.vmem [resolvable:$true] %s36
      %42 = dma.vmem_to_hbm [thread:$0]  %s37, 256, %s1, [#allocation4], 128, 128, 8
    $region13: #{tpu_custom_call.1} parent=1 // pred_fallthru
      _
    // Predicated region
    $region14: #{tpu_custom_call.1} parent=1 // pred_check
      _
    $region15: #{tpu_custom_call.1} parent=1 // pred_check_branch
      %44 = sbr.rel (0) target = $region17
    $region16: #{tpu_custom_call.1} parent=1 // pred_region
      %45 = dma.done [#allocation4], 256
    $region17: #{tpu_custom_call.1} parent=1 // pred_fallthru
      _
    %46 = vsyncpa [#allocation3], 1
    %47 = vsyncpa [#allocation4], 1

</llo_original>
